<compile_context>
chip_gen: v6e
topology: v6e:2x2x1
jax: 0.10.0
libtpu: 0.0.40
codegen_flags: <defaults>
</compile_context>

<pallas_src>
import functools
import math

import jax
import jax.numpy as jnp
from jax.experimental import pallas as pl
from jax.experimental.pallas import tpu as pltpu


COMPUTE_DTYPE = jnp.bfloat16   # MXU operand dtype; accumulation is always f32
LN_EPS = 1e-6                  # torchvision ViT uses LayerNorm(eps=1e-6)


def _default_vmem_limit():
    # ~75% of physical VMEM: 48 MiB on v7x (64 MiB/TC), 96 MiB on v5e/v6e (128 MiB).
    try:
        cap = getattr(pltpu.get_tpu_info(), "vmem_capacity_bytes", None)
        if cap:
            return int(cap * 3 // 4)
    except Exception:
        pass
    return 48 * 1024 * 1024


_VMEM_LIMIT = _default_vmem_limit()


# ------------------------------ tiling helpers -------------------------------

def _sublane_align(dtype):
    return {4: 8, 2: 16, 1: 32}.get(jnp.dtype(dtype).itemsize, 8)


def _pick_tile(dim, cap, align):
    """Largest tile <= cap that is a multiple of `align` and divides `dim`.
    Falls back to the full dim (always a legal BlockSpec) when nothing fits.
    # TODO(synk): ragged dims (e.g. batch*197 token rows at ViT-base) fall back to
    # one full block; production would use a pl.cdiv grid with masked partial rows.
    """
    if dim <= cap:
        return dim
    t = (cap // align) * align
    while t >= align:
        if dim % t == 0:
            return t
        t -= align
    return dim


# ------------------------- fused tiled linear kernel --------------------------
# y = l2norm?( act( LN?(x) @ w + b ) + residual? )
# ref order: x, w, b, [ln_g, ln_b], [residual], out, [acc (multi-K)], [xn (LN)]

def _linear_kernel(*refs, activation, ln, residual, l2norm, multi_k, eps, norm_eps):
    it = iter(refs)
    x_ref = next(it); w_ref = next(it); b_ref = next(it)
    g_ref = bb_ref = r_ref = None
    if ln:
        g_ref = next(it); bb_ref = next(it)
    if residual:
        r_ref = next(it)
    o_ref = next(it)
    acc_ref = next(it) if multi_k else None
    xn_ref = next(it) if ln else None

    def finalize(acc_f32):
        y = acc_f32 + b_ref[...].astype(jnp.float32)
        if activation == "relu":
            y = jnp.maximum(y, 0.0)
        elif activation == "gelu":
            # exact (erf) GELU, matching torch nn.GELU() default
            y = 0.5 * y * (1.0 + jax.lax.erf(y * (1.0 / math.sqrt(2.0))))
        if residual:
            y = y + r_ref[...].astype(jnp.float32)
        if l2norm:  # F.normalize(dim=1); wrapper guarantees full row in this tile
            ss = jnp.sum(y * y, axis=-1, keepdims=True)
            y = y * jax.lax.rsqrt(jnp.maximum(ss, norm_eps * norm_eps))
        o_ref[...] = y.astype(o_ref.dtype)

    if ln:
        # Fused pre-LayerNorm: compute once per row block (j == 0) into VMEM
        # scratch, reuse across all N tiles (no per-tile recompute).
        @pl.when(pl.program_id(1) == 0)
        def _():
            xf = x_ref[...].astype(jnp.float32)
            mean = jnp.mean(xf, axis=-1, keepdims=True)
            xc = xf - mean
            var = jnp.mean(xc * xc, axis=-1, keepdims=True)
            xn = xc * jax.lax.rsqrt(var + eps)
            xn_ref[...] = (xn * g_ref[...].astype(jnp.float32)
                           + bb_ref[...].astype(jnp.float32)).astype(xn_ref.dtype)
        x = xn_ref[...]
    else:
        x = x_ref[...]

    # bf16 (or input-dtype) MXU matmul, f32 accumulation.
    part = jnp.dot(x, w_ref[...], preferred_element_type=jnp.float32)

    if multi_k:
        k = pl.program_id(2)

        @pl.when(k == 0)
        def _():
            acc_ref[...] = jnp.zeros_like(acc_ref)

        acc_ref[...] += part

        @pl.when(k == pl.num_programs(2) - 1)
        def _():
            finalize(acc_ref[...])
    else:
        finalize(part)


def linear_pallas(x, w, b, activation="none", ln=None, residual=None,
                  l2norm=False, out_dtype=None, ln_eps=LN_EPS, norm_eps=1e-12):
    """y = l2norm?(act(LN?(x) @ w + b) + residual?); w stored (in, out) == torch W.T."""
    M, K = x.shape
    K2, N = w.shape
    assert K == K2
    out_dtype = out_dtype or x.dtype
    fuse_ln = ln is not None
    fuse_res = residual is not None

    sl = _sublane_align(x.dtype)
    tm = _pick_tile(M, 512, sl)
    tn = _pick_tile(N, 512, 128)
    tk = K if (fuse_ln or K <= 3072) else _pick_tile(K, 1536, 128)
    grid = (M // tm, N // tn, K // tk)
    multi_k = grid[2] > 1
    if l2norm:
        assert grid[1] == 1, "l2norm fusion needs the full output row in one N tile"

    in_specs = [
        pl.BlockSpec((tm, tk), lambda i, j, k: (i, k)),
        pl.BlockSpec((tk, tn), lambda i, j, k: (k, j)),
        pl.BlockSpec((1, tn), lambda i, j, k: (0, j)),
    ]
    args = [x, w, b.reshape(1, N).astype(jnp.float32)]
    if fuse_ln:
        g, bb = ln
        in_specs += [pl.BlockSpec((1, tk), lambda i, j, k: (0, k)),
                     pl.BlockSpec((1, tk), lambda i, j, k: (0, k))]
        args += [g.reshape(1, K).astype(jnp.float32),
                 bb.reshape(1, K).astype(jnp.float32)]
    if fuse_res:
        assert residual.shape == (M, N)
        in_specs += [pl.BlockSpec((tm, tn), lambda i, j, k: (i, j))]
        args += [residual]

    scratch = []
    if multi_k:
        scratch.append(pltpu.VMEM((tm, tn), jnp.float32))
    if fuse_ln:
        scratch.append(pltpu.VMEM((tm, tk), x.dtype))

    itemsize = jnp.dtype(x.dtype).itemsize
    cost = pl.CostEstimate(
        flops=2 * M * N * K,
        transcendentals=(M * N if activation == "gelu" else 0),
        bytes_accessed=(M * K + K * N + M * N * (2 if fuse_res else 1)) * itemsize,
    )

    # When LN is fused, the j axis reuses a scratch written at j==0, so it must
    # stay in-order ("arbitrary"); i stays parallel for megacore sharding.
    dims = (("parallel", "arbitrary", "arbitrary") if fuse_ln
            else ("parallel", "parallel", "arbitrary"))

    return pl.pallas_call(
        functools.partial(_linear_kernel, activation=activation, ln=fuse_ln,
                          residual=fuse_res, l2norm=l2norm, multi_k=multi_k,
                          eps=ln_eps, norm_eps=norm_eps),
        out_shape=jax.ShapeDtypeStruct((M, N), out_dtype),
        grid=grid,
        in_specs=in_specs,
        out_specs=pl.BlockSpec((tm, tn), lambda i, j, k: (i, j)),
        scratch_shapes=scratch,
        compiler_params=pltpu.CompilerParams(
            dimension_semantics=dims, vmem_limit_bytes=_VMEM_LIMIT),
        cost_estimate=cost,
    )(*args)


# ---------------- attention + fused out-projection (+ residual) ---------------
# One grid step = a block of `bimg` images.  Heads are built from the packed
# (S, 3*hidden) qkv tile into a VMEM scratch slab (bounded vreg pressure), then
# a single (S, hidden) @ (hidden, hidden) out-proj matmul + bias + residual is
# stored lane-dense.  The attention activation never touches HBM.

def _attn_kernel(qkv_ref, res_ref, ow_ref, ob_ref, o_ref, attn_ref,
                 *, bimg, num_heads, dh, scale):
    hidden = num_heads * dh
    for b in range(bimg):                                   # static, unrolled
        qkv = qkv_ref[b]                                    # (S, 3*hidden)
        for h in range(num_heads):                          # static, unrolled
            q = qkv[:, h * dh:(h + 1) * dh]
            k = qkv[:, hidden + h * dh: hidden + (h + 1) * dh]
            v = qkv[:, 2 * hidden + h * dh: 2 * hidden + (h + 1) * dh]
            # scores = q @ k^T (contract feature dims; no explicit transpose)
            s = jax.lax.dot_general(q, k, (((1,), (1,)), ((), ())),
                                    preferred_element_type=jnp.float32) * scale
            s = s - jnp.max(s, axis=-1, keepdims=True)
            p = jnp.exp(s)
            p = p * pl.reciprocal(jnp.sum(p, axis=-1, keepdims=True))  # exact
            head = jnp.dot(p.astype(v.dtype), v, preferred_element_type=jnp.float32)
            attn_ref[:, h * dh:(h + 1) * dh] = head.astype(attn_ref.dtype)
        # fused out-projection + bias + residual; one lane-dense store per image.
        o = jnp.dot(attn_ref[...], ow_ref[...], preferred_element_type=jnp.float32)
        o = o + ob_ref[...].astype(jnp.float32) + res_ref[b].astype(jnp.float32)
        o_ref[b] = o.astype(o_ref.dtype)


def attention_pallas(qkv, residual, out_w, out_b, num_heads, dh, scale):
    """qkv: (N, S, 3*hidden) packed [Q|K|V] head-major.  Returns attn@out_w+out_b+residual."""
    N, S, three_h = qkv.shape
    hidden = num_heads * dh
    assert three_h == 3 * hidden and residual.shape == (N, S, hidden)

    # Batch several images per grid step (amortize ~0.35us/step, bigger DMA tiles)
    # while keeping the parallel grid extent >= 2 for v7x's 2 TensorCores.
    bimg = 1
    for cand in range(1, min(N, 8) + 1):
        if N % cand == 0 and (N // cand >= 2 or N == 1):
            bimg = cand
    grid = (N // bimg,)

    itemsize = jnp.dtype(qkv.dtype).itemsize
    cost = pl.CostEstimate(
        flops=N * num_heads * 4 * S * S * dh + N * 2 * S * hidden * hidden,
        transcendentals=N * num_heads * S * S,
        bytes_accessed=(N * S * (3 * hidden + 2 * hidden) + hidden * hidden) * itemsize,
    )

    return pl.pallas_call(
        functools.partial(_attn_kernel, bimg=bimg, num_heads=num_heads,
                          dh=dh, scale=scale),
        out_shape=jax.ShapeDtypeStruct((N, S, hidden), qkv.dtype),
        grid=grid,
        in_specs=[pl.BlockSpec((bimg, S, three_h), lambda i: (i, 0, 0)),
                  pl.BlockSpec((bimg, S, hidden), lambda i: (i, 0, 0)),
                  pl.BlockSpec((hidden, hidden), lambda i: (0, 0)),
                  pl.BlockSpec((1, hidden), lambda i: (0, 0))],
        out_specs=pl.BlockSpec((bimg, S, hidden), lambda i: (i, 0, 0)),
        scratch_shapes=[pltpu.VMEM((S, hidden), qkv.dtype)],
        compiler_params=pltpu.CompilerParams(
            dimension_semantics=("parallel",),
            vmem_limit_bytes=_VMEM_LIMIT),
        cost_estimate=cost,
    )(qkv, residual, out_w, out_b.reshape(1, hidden).astype(jnp.float32))


# ---------------------------- parameter creation ------------------------------

def init_params(key, *, in_ch, img, patch, hidden, mlp_dim, num_heads, depth, feat_dim):
    # Synthetic deterministic init (module __init__ gives shapes; no checkpoint load).
    n_patches = (img // patch) ** 2
    seq = n_patches + 1
    keys = iter(jax.random.split(key, 64))

    def normal(shape, std=0.02):
        return (std * jax.random.normal(next(keys), shape)).astype(jnp.float32)

    params = dict(
        patch=patch, hidden=hidden, num_heads=num_heads,
        patch_w=normal((in_ch * patch * patch, hidden)),  # == Conv2d(in_ch, hidden, p, stride=p)
        patch_b=jnp.zeros((hidden,), jnp.float32),
        cls_token=normal((1, 1, hidden)),
        pos_emb=normal((1, seq, hidden)),
        ln_g=jnp.ones((hidden,), jnp.float32),
        ln_b=jnp.zeros((hidden,), jnp.float32),
        head_w1=normal((hidden, hidden)),                  # head == 'mlp'
        head_b1=jnp.zeros((hidden,), jnp.float32),
        head_w2=normal((hidden, feat_dim)),
        head_b2=jnp.zeros((feat_dim,), jnp.float32),
        blocks=[],
    )
    for _ in range(depth):
        params["blocks"].append(dict(
            ln1_g=jnp.ones((hidden,), jnp.float32),
            ln1_b=jnp.zeros((hidden,), jnp.float32),
            qkv_w=normal((hidden, 3 * hidden)),
            qkv_b=jnp.zeros((3 * hidden,), jnp.float32),
            out_w=normal((hidden, hidden)),
            out_b=jnp.zeros((hidden,), jnp.float32),
            ln2_g=jnp.ones((hidden,), jnp.float32),
            ln2_b=jnp.zeros((hidden,), jnp.float32),
            mlp_w1=normal((hidden, mlp_dim)),
            mlp_b1=jnp.zeros((mlp_dim,), jnp.float32),
            mlp_w2=normal((mlp_dim, hidden)),
            mlp_b2=jnp.zeros((hidden,), jnp.float32),
        ))
    return params


# ------------------------------- forward pass ---------------------------------

def supcon_vit_forward(params, x):
    """SupConViT.forward: feat = F.normalize(head(encoder(x)), dim=1)."""
    N, C, H, W = x.shape
    p = params["patch"]
    hidden = params["hidden"]
    num_heads = params["num_heads"]
    nh, nw = H // p, W // p
    dh = hidden // num_heads
    scale = 1.0 / math.sqrt(dh)
    cdt = COMPUTE_DTYPE

    def cw(a):  # cast weight/activation slab to the MXU compute dtype (bf16)
        return a.astype(cdt)

    # --- ViT patch embedding (Conv2d k=p, stride=p  ==  patchify + matmul) ---
    patches = x.reshape(N, C, nh, p, nw, p).transpose(0, 2, 4, 1, 3, 5)
    patches = patches.reshape(N * nh * nw, C * p * p).astype(cdt)
    emb = linear_pallas(patches, cw(params["patch_w"]), params["patch_b"])
    emb = emb.reshape(N, nh * nw, hidden)

    # --- class token + positional embedding (wrapper glue) ---
    # TODO(synk): pos_emb add could be fused into the patch-embed linear via the
    # residual path (modular index_map) plus a tiny cls-row write.
    cls = jnp.broadcast_to(params["cls_token"].astype(cdt), (N, 1, hidden))
    xs = jnp.concatenate([cls, emb], axis=1) + params["pos_emb"].astype(cdt)
    S = xs.shape[1]
    xs2 = xs.reshape(N * S, hidden)                        # 2-D lane-dense slab

    # --- transformer encoder blocks (pre-LN); LN / residual / out-proj fused ---
    for blk in params["blocks"]:
        # LN1 fused into the packed QKV projection (no HBM transposes ever).
        qkv = linear_pallas(xs2, cw(blk["qkv_w"]), blk["qkv_b"],
                            ln=(blk["ln1_g"], blk["ln1_b"]))        # (N*S, 3*hidden)
        # attention + out-projection + residual, all in one kernel.
        xs2 = attention_pallas(qkv.reshape(N, S, 3 * hidden),
                               xs2.reshape(N, S, hidden),
                               cw(blk["out_w"]), blk["out_b"],
                               num_heads, dh, scale).reshape(N * S, hidden)
        # LN2 + exact-erf GELU fused into MLP-1; residual fused into MLP-2.
        y = linear_pallas(xs2, cw(blk["mlp_w1"]), blk["mlp_b1"],
                          activation="gelu", ln=(blk["ln2_g"], blk["ln2_b"]))
        xs2 = linear_pallas(y, cw(blk["mlp_w2"]), blk["mlp_b2"], residual=xs2)

    # --- final encoder LN + MLP projection head + F.normalize (all fused) ---
    # LayerNorm is per-row, so ln(xs)[:, 0] == ln(xs[:, 0]); fuse it into head_w1.
    cls_feat = xs2.reshape(N, S, hidden)[:, 0]                      # (N, hidden)
    h = linear_pallas(cls_feat, cw(params["head_w1"]), params["head_b1"],
                      activation="relu", ln=(params["ln_g"], params["ln_b"]))
    feat = linear_pallas(h, cw(params["head_w2"]), params["head_b2"],
                         l2norm=True, out_dtype=jnp.float32)        # F.normalize(dim=1)
    return feat


# ----------------------------------- main --------------------------------------

if __name__ == "__main__":
    key = jax.random.PRNGKey(0)
    kp, kx = jax.random.split(key)

    # Small-scale ViT config (structure of vit_base, scaled down):
    #   image 16x16, 3 channels, patch 8 -> 4 patches + cls = 5 tokens
    #   hidden 32, 4 heads, mlp 64, depth 2, projection feat_dim 16
    params = init_params(kp, in_ch=3, img=16, patch=8, hidden=32, mlp_dim=64,
                         num_heads=4, depth=2, feat_dim=16)

    x = jax.random.normal(kx, (2, 3, 16, 16), dtype=jnp.float32)  # NCHW, like PyTorch

    out = supcon_vit_forward(params, x)
    out = jax.block_until_ready(out)

    assert out.shape == (2, 16) and out.dtype == jnp.float32
    # rows are L2-normalized
    norms = jnp.linalg.norm(out, axis=1)
    assert bool(jnp.all(jnp.abs(norms - 1.0) < 2e-3))
    print("KERNEL_OK")
</pallas_src>

<mosaic_0001>
module attributes {stable_mosaic.version = 11 : i64} {
  func.func @_linear_kernel(%arg0: i32, %arg1: i32, %arg2: i32, %arg3: memref<8x192xbf16, #tpu.memory_space<vmem>>, %arg4: memref<192x32xbf16, #tpu.memory_space<vmem>>, %arg5: memref<1x32xf32, #tpu.memory_space<vmem>>, %arg6: memref<8x32xbf16, #tpu.memory_space<vmem>>) attributes {dimension_semantics = [#tpu.dimension_semantics<parallel>, #tpu.dimension_semantics<parallel>, #tpu.dimension_semantics<arbitrary>], iteration_bounds = array<i64: 1, 1, 1>, scalar_prefetch = 0 : i64, scratch_operands = 0 : i64, tpu.core_type = #tpu.core_type<tc>, window_params = [{transform_indices = @transform_0, window_bounds = array<i64: 8, 192>}, {transform_indices = @transform_1, window_bounds = array<i64: 192, 32>}, {transform_indices = @transform_2, window_bounds = array<i64: 1, 32>}, {transform_indices = @transform_3, window_bounds = array<i64: 8, 32>}]} {
    %c0 = arith.constant 0 : index
    %c0_0 = arith.constant 0 : index
    %0 = vector.load %arg3[%c0, %c0_0] : memref<8x192xbf16, #tpu.memory_space<vmem>>, vector<8x192xbf16>
    %c0_1 = arith.constant 0 : index
    %c0_2 = arith.constant 0 : index
    %1 = vector.load %arg4[%c0_1, %c0_2] : memref<192x32xbf16, #tpu.memory_space<vmem>>, vector<192x32xbf16>
    %cst = arith.constant dense<0.000000e+00> : vector<8x32xf32>
    %2 = tpu.matmul %0, %1, %cst {dimension_numbers = #tpu.dot_dimension_numbers<[1], [0], [0], [1], [0, 0, 1, 1], [], []>} : vector<8x192xbf16>, vector<192x32xbf16>, vector<8x32xf32> -> vector<8x32xf32>
    %c0_3 = arith.constant 0 : index
    %c0_4 = arith.constant 0 : index
    %3 = vector.load %arg5[%c0_3, %c0_4] : memref<1x32xf32, #tpu.memory_space<vmem>>, vector<1x32xf32>
    %4 = vector.broadcast %3 : vector<1x32xf32> to vector<8x32xf32>
    %5 = arith.addf %2, %4 : vector<8x32xf32>
    %6 = arith.truncf %5 : vector<8x32xf32> to vector<8x32xbf16>
    %c0_5 = arith.constant 0 : index
    %c0_6 = arith.constant 0 : index
    %7 = vector.load %arg6[%c0_5, %c0_6] : memref<8x32xbf16, #tpu.memory_space<vmem>>, vector<8x32xbf16>
    tpu.vector_store %arg6[%c0_5, %c0_6], %6 {strides = array<i32>} : memref<8x32xbf16, #tpu.memory_space<vmem>>, vector<8x32xbf16>,
    return
  }
  func.func @transform_0(%arg0: i32, %arg1: i32, %arg2: i32) -> (i32, i32) {
    %c0_i32 = arith.constant 0 : i32
    return %arg0, %arg2 : i32, i32
  }
  func.func @transform_1(%arg0: i32, %arg1: i32, %arg2: i32) -> (i32, i32) {
    %c0_i32 = arith.constant 0 : i32
    return %arg2, %arg1 : i32, i32
  }
  func.func @transform_2(%arg0: i32, %arg1: i32, %arg2: i32) -> (i32, i32) {
    %c0_i32 = arith.constant 0 : i32
    %c0_i32_0 = arith.constant 0 : i32
    return %c0_i32, %arg1 : i32, i32
  }
  func.func @transform_3(%arg0: i32, %arg1: i32, %arg2: i32) -> (i32, i32) {
    %c0_i32 = arith.constant 0 : i32
    return %arg0, %arg1 : i32, i32
  }
}

</mosaic_0001>

<llo_original>
// kernel: tpu_custom_call.1
$region0: #{tpu_custom_call.1}
  #allocation0 [shape = 'u32[]', space=smem, size = 0x4, offset = 0x4, fixed_abs, tag = 'smem constant byte address 0x4 - core index']
  #allocation1 [shape = 'u32[144,128]{1,0:T(1,128)}', space=vmem, size = 0x12000, scoped, tag = 'internal scratch']
  %s0 = inlined_call_operand.vmem [shape: bf16[8,192], index: 0, kind: input, shape index: {}]
  %s1 = inlined_call_operand.vmem [shape: bf16[192,32], index: 1, kind: input, shape index: {}]
  %s2 = inlined_call_operand.vmem [shape: f32[1,32], index: 2, kind: input, shape index: {}]
  %s3 = inlined_call_operand.hbm [shape: bf16[8,32], index: 3, kind: output, shape index: {}]
  %s4 = sld [smem:[#allocation0]]
  $region22: #{tpu_custom_call.1} parent=0
    _
  %s6 = ssub.s32 1, %s4
  %s7 = scalar_select 0, %s6, %s4
  $region1: #{tpu_custom_call.1} parent=0
    #allocation2 [shape = 'u8[2048]{0}', space=vmem, size = 0x800, scoped, tag = 'output window, operand 0, single buffered']
    #allocation3 [shape = 's32[1]{0}', space=sflag, size = 0x4, scoped, tag = 'scoped memory for tpu_custom_call.1']
    %8 = vsyncpa [#allocation3], 0
    // Predicated region
    $region2: #{tpu_custom_call.1} parent=1 // pred_check
      _
    $region3: #{tpu_custom_call.1} parent=1 // pred_check_branch
      %10 = sbr.rel (0) target = $region5
    $region4: #{tpu_custom_call.1} parent=1 // pred_region
      _
    $region5: #{tpu_custom_call.1} parent=1 // pred_fallthru
      _
    // Predicated region
    $region6: #{tpu_custom_call.1} parent=1 // pred_check
      _
    $region7: #{tpu_custom_call.1} parent=1 // pred_check_branch
      %12 = sbr.rel (0) target = $region9
    $region8: #{tpu_custom_call.1} parent=1 // pred_region
      _
    $region9: #{tpu_custom_call.1} parent=1 // pred_fallthru
      _
    // Predicated region
    $region10: #{tpu_custom_call.1} parent=1 // pred_check
      _
    $region11: #{tpu_custom_call.1} parent=1 // pred_check_branch
      %14 = sbr.rel (0) target = $region13
    $region12: #{tpu_custom_call.1} parent=1 // pred_region
      _
    $region13: #{tpu_custom_call.1} parent=1 // pred_fallthru
      _
    %v16 = vld [vmem:[%s0] sm:$0xff]
    %v17 = vld [vmem:[%s1] sm:$0xf]
    %v18 = vld [vmem:[%s1 + $0x4] sm:$0xf]
    %v19 = vld [vmem:[%s1 + $0x8] sm:$0xf]
    %v20 = vld [vmem:[%s1 + $0xc] sm:$0xf]
    %v21 = vld [vmem:[%s1 + $0x10] sm:$0xf]
    %v22 = vld [vmem:[%s1 + $0x14] sm:$0xf]
    %v23 = vld [vmem:[%s1 + $0x18] sm:$0xf]
    %v24 = vld [vmem:[%s1 + $0x1c] sm:$0xf]
    %v25 = vld [vmem:[%s1 + $0x20] sm:$0xf]
    %v26 = vld [vmem:[%s1 + $0x24] sm:$0xf]
    %v27 = vld [vmem:[%s1 + $0x28] sm:$0xf]
    %v28 = vld [vmem:[%s1 + $0x2c] sm:$0xf]
    %v29 = vld [vmem:[%s1 + $0x30] sm:$0xf]
    %v30 = vld [vmem:[%s1 + $0x34] sm:$0xf]
    %v31 = vld [vmem:[%s1 + $0x38] sm:$0xf]
    %v32 = vld [vmem:[%s1 + $0x3c] sm:$0xf]
    %v33 = vld [vmem:[%s1 + $0x40] sm:$0xf]
    %v34 = vld [vmem:[%s1 + $0x44] sm:$0xf]
    %v35 = vld [vmem:[%s1 + $0x48] sm:$0xf]
    %v36 = vld [vmem:[%s1 + $0x4c] sm:$0xf]
    %v37 = vld [vmem:[%s1 + $0x50] sm:$0xf]
    %v38 = vld [vmem:[%s1 + $0x54] sm:$0xf]
    %v39 = vld [vmem:[%s1 + $0x58] sm:$0xf]
    %v40 = vld [vmem:[%s1 + $0x5c] sm:$0xf]
    %v41 = vld [vmem:[%s2] sm:$0x1]
    %v43 = vlaneseq
    %v44 = vshrl.u32 %v43, 7
    %v45 = vsub.s32 0, %v44
    %v46 = vrot.slane %v41, %v45
    %v49 = vunpack.c.l.b16 %v16
    %v50 = vunpack.c.h.b16 %v16
    %v51 = vpack.c.b16 %v49, %v49
    %v52 = vpack.c.b16 %v50, %v50
    %v78 = vunpack.c.l.b16 %v17
    %v79 = vunpack.c.l.b16 %v18
    %v80 = vunpack.c.l.b16 %v19
    %v81 = vunpack.c.l.b16 %v20
    %v82 = vunpack.c.l.b16 %v21
    %v83 = vunpack.c.l.b16 %v22
    %v84 = vunpack.c.l.b16 %v23
    %v85 = vunpack.c.l.b16 %v24
    %v86 = vunpack.c.l.b16 %v25
    %v87 = vunpack.c.l.b16 %v26
    %v88 = vunpack.c.l.b16 %v27
    %v89 = vunpack.c.l.b16 %v28
    %v90 = vunpack.c.l.b16 %v29
    %v91 = vunpack.c.l.b16 %v30
    %v92 = vunpack.c.l.b16 %v31
    %v93 = vunpack.c.l.b16 %v32
    %v94 = vunpack.c.l.b16 %v33
    %v95 = vunpack.c.l.b16 %v34
    %v96 = vunpack.c.l.b16 %v35
    %v97 = vunpack.c.l.b16 %v36
    %v98 = vunpack.c.l.b16 %v37
    %v99 = vunpack.c.l.b16 %v38
    %v100 = vunpack.c.l.b16 %v39
    %v101 = vunpack.c.l.b16 %v40
    %v102 = vpack.c.b16 %v79, %v78
    %v103 = vpack.c.b16 %v81, %v80
    %v104 = vpack.c.b16 %v83, %v82
    %v105 = vpack.c.b16 %v85, %v84
    %v106 = vpack.c.b16 %v87, %v86
    %v107 = vpack.c.b16 %v89, %v88
    %v108 = vpack.c.b16 %v91, %v90
    %v109 = vpack.c.b16 %v93, %v92
    %v110 = vpack.c.b16 %v95, %v94
    %v111 = vpack.c.b16 %v97, %v96
    %v112 = vpack.c.b16 %v99, %v98
    %v113 = vpack.c.b16 %v101, %v100
    %vm126 = vcmask 523264
    %v128 = vsel %vm126, %v52, 0
    %130 = vmatprep.subr.bf16.mxu0 0
    %131 = vmatpush1.bf16.msra.mxu0 %v109
    %132 = vmatprep.subr.bf16.mxu0 0
    %133 = vmatpush1.bf16.msra.mxu0 %v108
    %134 = vmatprep.subr.bf16.mxu0 0
    %135 = vmatpush1.bf16.msra.mxu0 %v107
    %136 = vmatprep.subr.bf16.mxu0 0
    %137 = vmatpush1.bf16.msra.mxu0 %v106
    %138 = vmatprep.subr.bf16.mxu0 0
    %139 = vmatpush1.bf16.msra.mxu0 %v105
    %140 = vmatprep.subr.bf16.mxu0 0
    %141 = vmatpush1.bf16.msra.mxu0 %v104
    %142 = vmatprep.subr.bf16.mxu0 0
    %143 = vmatpush1.bf16.msra.mxu0 %v103
    %144 = vmatprep.subr.bf16.mxu0 0
    %145 = vmatpush1.bf16.msra.mxu0 %v102
    %146 = vmatprep.subr.bf16.mxu0 0
    %147 = vmatpush2.bf16.msra.mxu0 0
    %148 = vmatprep.subr.bf16.mxu0 0
    %149 = vmatpush2.bf16.msra.mxu0 0
    %150 = vmatprep.subr.bf16.mxu0 0
    %151 = vmatpush2.bf16.msra.mxu0 0
    %152 = vmatprep.subr.bf16.mxu0 0
    %153 = vmatpush2.bf16.msra.mxu0 0
    %154 = vmatprep.subr.bf16.mxu0 0
    %155 = vmatpush2.bf16.msra.mxu0 %v113
    %156 = vmatprep.subr.bf16.mxu0 0
    %157 = vmatpush2.bf16.msra.mxu0 %v112
    %158 = vmatprep.subr.bf16.mxu0 0
    %159 = vmatpush2.bf16.msra.mxu0 %v111
    %160 = vmatprep.subr.bf16.mxu0 0
    %161 = vmatpush2.bf16.msra.mxu0 %v110
    %162 = vmatprep.mubr.bf16.mxu0 %v128
    %163 = vmatmul.mubr.bf16.gmra.mxu0 %v51
    %v164 = vpop.f32.mrf.mxu0
    %v165 = vadd.f32 %v46, %v164
    %v166 = vpop.f32.mrf.mxu0
    %v167 = vpop.f32.mrf.mxu0
    %v168 = vpop.f32.mrf.mxu0
    %169 = vdwg.mxu0
    %v170 = vpack.c.bf16 %v165, %v165
    %vm171 = vcmask 257024
    %172 = vst.msk [vmem:[#allocation2] sm:$0xf] %vm171, %v170
    // Predicated region
    $region14: #{tpu_custom_call.1} parent=1 // pred_check
      _
    $region15: #{tpu_custom_call.1} parent=1 // pred_check_branch
      %174 = sbr.rel (0) target = $region17
    $region16: #{tpu_custom_call.1} parent=1 // pred_region
      %s176 = ssub.s32 64, 64
      %177 = vsyncadd [#allocation3], %s176
      %s179 = sshll.u32 [#allocation2], 4
      %s180 = int_to_ptr.vmem [resolvable:$true] %s179
      %182 = dma.vmem_to_hbm [thread:$0]  %s180, 64, %s3, [#allocation3]
    $region17: #{tpu_custom_call.1} parent=1 // pred_fallthru
      _
    // Predicated region
    $region18: #{tpu_custom_call.1} parent=1 // pred_check
      _
    $region19: #{tpu_custom_call.1} parent=1 // pred_check_branch
      %184 = sbr.rel (0) target = $region21
    $region20: #{tpu_custom_call.1} parent=1 // pred_region
      %185 = dma.done [#allocation3], 64
    $region21: #{tpu_custom_call.1} parent=1 // pred_fallthru
      _
    %186 = vsyncpa [#allocation3], 1

</llo_original>
